<compile_context>
chip_gen: v6e
topology: v6e:2x2x1
jax: 0.10.0
libtpu: 0.0.40
codegen_flags: <defaults>
</compile_context>

<pallas_src>
import jax
import jax.numpy as jnp
from jax import lax
from jax.experimental import pallas as pl
from jax.experimental.pallas import tpu as pltpu


def make_context_attention_kernel(heads: int, dim_head: int, eps: float = 1e-5,
                                  compute_dtype=jnp.bfloat16):
    inner = heads * dim_head

    def kernel(x_ref, gamma_ref, beta_ref, wqkv_ref, wo_ref, o_ref):
        b_blk, n, d_model = x_ref.shape
        rows = b_blk * n

        # ---- LayerNorm (PyTorch semantics: biased variance, eps), f32 stats
        x = x_ref[...].reshape(rows, d_model).astype(jnp.float32)
        mean = jnp.mean(x, axis=-1, keepdims=True)
        xc = x - mean
        var = jnp.mean(xc * xc, axis=-1, keepdims=True)
        xn = xc * lax.rsqrt(var + eps)
        xn = xn * gamma_ref[...] + beta_ref[...]               # (rows, D) f32

        # ---- fused QKV projection: one lane-dense MXU call -----------------
        # (rows, D) @ (D, 3*inner) -> (rows, 3*inner); f32 accumulate.
        # 1/sqrt(dim_head) is already folded into the Q columns.
        qkv = jnp.dot(xn.astype(compute_dtype), wqkv_ref[...],
                      preferred_element_type=jnp.float32)      # (rows, 3*inner)

        # ---- multi-head attention (heads is a small static constant) -------
        # Activation-only work per head; all weight matmuls remain fused.
        o_heads = []
        for h in range(heads):
            q = qkv[:, h * dim_head:(h + 1) * dim_head]
            k = qkv[:, inner + h * dim_head:inner + (h + 1) * dim_head]
            v = qkv[:, 2 * inner + h * dim_head:2 * inner + (h + 1) * dim_head]
            q = q.reshape(b_blk, n, dim_head).astype(compute_dtype)
            k = k.reshape(b_blk, n, dim_head).astype(compute_dtype)
            v = v.reshape(b_blk, n, dim_head).astype(compute_dtype)

            # scores: batched over the batch-block dim (flash-ref pattern)
            s = jnp.einsum('bnd,bmd->bnm', q, k,
                           preferred_element_type=jnp.float32)  # (b_blk, N, N)
            s = s - jnp.max(s, axis=-1, keepdims=True)
            p = jnp.exp(s)
            l = jnp.sum(p, axis=-1, keepdims=True)               # (b_blk, N, 1)
            p = p * pl.reciprocal(l, approx=True)                # normalized probs

            o_h = jnp.einsum('bnm,bmd->bnd', p.astype(compute_dtype), v,
                             preferred_element_type=jnp.float32)  # (b_blk, N, d)
            o_heads.append(o_h)

        # lane-concat the small per-head outputs -> (rows, inner)
        o_cat = jnp.concatenate(o_heads, axis=-1).reshape(rows, inner)

        # ---- fused output projection: one (rows, inner) @ (inner, D) -------
        y = jnp.dot(o_cat.astype(compute_dtype), wo_ref[...],
                    preferred_element_type=jnp.float32)          # (rows, D)
        o_ref[...] = y.reshape(b_blk, n, d_model).astype(o_ref.dtype)

    return kernel


def context_attention(x, gamma, beta, w_qkv, w_out, *, heads, dim_head,
                      compute_dtype=jnp.bfloat16, block_rows=256):
    B, N, D = x.shape
    inner = heads * dim_head
    assert w_qkv.shape == (D, 3 * inner)
    assert w_out.shape == (inner, D)
    scale = dim_head ** (-0.5)

    # Batch block: B_blk*N ~ block_rows MXU rows per step; must divide B.
    b_blk = max(1, min(B, block_rows // max(N, 1)))
    while B % b_blk:
        b_blk -= 1
    grid = (B // b_blk,)

    f32 = jnp.float32
    # Weight prep ONCE in the wrapper (pure JAX): fold 1/sqrt(dim_head) into the
    # Q columns of the fused QKV weight, cast MXU operands to bf16.
    wqkv = jnp.concatenate(
        [w_qkv[:, :inner].astype(f32) * scale, w_qkv[:, inner:].astype(f32)],
        axis=1).astype(compute_dtype)                           # (D, 3*inner)
    wo = w_out.astype(compute_dtype)                            # (inner, D)
    gamma2 = gamma.reshape(1, D).astype(f32)
    beta2 = beta.reshape(1, D).astype(f32)

    kernel = make_context_attention_kernel(heads, dim_head,
                                           compute_dtype=compute_dtype)

    return pl.pallas_call(
        kernel,
        out_shape=jax.ShapeDtypeStruct((B, N, D), x.dtype),
        grid_spec=pl.GridSpec(
            grid=grid,
            in_specs=[
                pl.BlockSpec((b_blk, N, D), lambda i: (i, 0, 0)),     # x
                pl.BlockSpec((1, D), lambda i: (0, 0)),               # gamma
                pl.BlockSpec((1, D), lambda i: (0, 0)),               # beta
                pl.BlockSpec((D, 3 * inner), lambda i: (0, 0)),       # fused w_qkv
                pl.BlockSpec((inner, D), lambda i: (0, 0)),           # w_out
            ],
            out_specs=pl.BlockSpec((b_blk, N, D), lambda i: (i, 0, 0)),
        ),
        compiler_params=pltpu.CompilerParams(
            dimension_semantics=("parallel",)),
    )(x, gamma2, beta2, wqkv, wo)


if __name__ == "__main__":
    # Small shapes consistent with the module: dim=32, heads=2, dim_head=16
    B, N, D = 2, 8, 32
    heads, dim_head = 2, 16
    inner = heads * dim_head

    key = jax.random.PRNGKey(0)
    kx, kq, ko = jax.random.split(key, 3)

    x = jax.random.normal(kx, (B, N, D), dtype=jnp.float32)
    w_qkv = jax.random.normal(kq, (D, 3 * inner), dtype=jnp.float32) * (1.0 / D ** 0.5)
    w_out = jax.random.normal(ko, (inner, D), dtype=jnp.float32) * (1.0 / inner ** 0.5)
    gamma = jnp.ones((1, D), dtype=jnp.float32)   # LayerNorm weight init = 1
    beta = jnp.zeros((1, D), dtype=jnp.float32)   # LayerNorm bias init = 0

    out = context_attention(x, gamma, beta, w_qkv, w_out,
                            heads=heads, dim_head=dim_head)
    jax.block_until_ready(out)

    # pure-JAX f32 reference (module semantics); kernel uses bf16 MXU operands
    # with f32 accumulation, so tolerance is set accordingly.
    def ref(x):
        mu = jnp.mean(x, -1, keepdims=True)
        var = jnp.mean((x - mu) ** 2, -1, keepdims=True)
        xn = (x - mu) / jnp.sqrt(var + 1e-5) * gamma + beta
        qkv = xn @ w_qkv
        q, k, v = jnp.split(qkv, 3, axis=-1)

        def split_heads(t):
            return t.reshape(B, N, heads, dim_head).transpose(0, 2, 1, 3)

        q, k, v = map(split_heads, (q, k, v))
        dots = jnp.einsum("bhnd,bhmd->bhnm", q, k) * dim_head ** (-0.5)
        attn = jax.nn.softmax(dots, axis=-1)
        o = jnp.einsum("bhnm,bhmd->bhnd", attn, v)
        o = o.transpose(0, 2, 1, 3).reshape(B, N, inner)
        return o @ w_out

    assert jnp.allclose(out, ref(x), atol=1e-1, rtol=1e-1), \
        float(jnp.max(jnp.abs(out - ref(x))))
    print("KERNEL_OK")
</pallas_src>

<mosaic_0001>
module attributes {stable_mosaic.version = 11 : i64} {
  func.func @kernel(%arg0: i32, %arg1: memref<2x8x32xf32, #tpu.memory_space<vmem>>, %arg2: memref<1x32xf32, #tpu.memory_space<vmem>>, %arg3: memref<1x32xf32, #tpu.memory_space<vmem>>, %arg4: memref<32x96xbf16, #tpu.memory_space<vmem>>, %arg5: memref<32x32xbf16, #tpu.memory_space<vmem>>, %arg6: memref<2x8x32xf32, #tpu.memory_space<vmem>>) attributes {dimension_semantics = [#tpu.dimension_semantics<parallel>], iteration_bounds = array<i64: 1>, scalar_prefetch = 0 : i64, scratch_operands = 0 : i64, tpu.core_type = #tpu.core_type<tc>, window_params = [{transform_indices = @transform_0, window_bounds = array<i64: 2, 8, 32>}, {pipeline_mode = #tpu.pipeline_mode<synchronous>, transform_indices = @transform_1, window_bounds = array<i64: 1, 32>}, {pipeline_mode = #tpu.pipeline_mode<synchronous>, transform_indices = @transform_2, window_bounds = array<i64: 1, 32>}, {pipeline_mode = #tpu.pipeline_mode<synchronous>, transform_indices = @transform_3, window_bounds = array<i64: 32, 96>}, {pipeline_mode = #tpu.pipeline_mode<synchronous>, transform_indices = @transform_4, window_bounds = array<i64: 32, 32>}, {transform_indices = @transform_5, window_bounds = array<i64: 2, 8, 32>}]} {
    %c0 = arith.constant 0 : index
    %c0_0 = arith.constant 0 : index
    %c0_1 = arith.constant 0 : index
    %0 = vector.load %arg1[%c0, %c0_0, %c0_1] : memref<2x8x32xf32, #tpu.memory_space<vmem>>, vector<2x8x32xf32>
    %1 = vector.shape_cast %0 : vector<2x8x32xf32> to vector<16x32xf32>
    %cst = arith.constant dense<0.000000e+00> : vector<16xf32>
    %2 = vector.multi_reduction <add>, %1, %cst [1] : vector<16x32xf32> to vector<16xf32>
    %3 = vector.shape_cast %2 : vector<16xf32> to vector<16x1xf32>
    %cst_2 = arith.constant 3.200000e+01 : f32
    %4 = vector.broadcast %cst_2 : f32 to vector<16x1xf32>
    %5 = arith.divf %3, %4 : vector<16x1xf32>
    %6 = vector.broadcast %5 : vector<16x1xf32> to vector<16x32xf32>
    %7 = arith.subf %1, %6 : vector<16x32xf32>
    %8 = arith.mulf %7, %7 : vector<16x32xf32>
    %cst_3 = arith.constant dense<0.000000e+00> : vector<16xf32>
    %9 = vector.multi_reduction <add>, %8, %cst_3 [1] : vector<16x32xf32> to vector<16xf32>
    %10 = vector.shape_cast %9 : vector<16xf32> to vector<16x1xf32>
    %cst_4 = arith.constant 3.200000e+01 : f32
    %11 = vector.broadcast %cst_4 : f32 to vector<16x1xf32>
    %12 = arith.divf %10, %11 : vector<16x1xf32>
    %cst_5 = arith.constant 9.99999974E-6 : f32
    %13 = vector.broadcast %cst_5 : f32 to vector<16x1xf32>
    %14 = arith.addf %12, %13 : vector<16x1xf32>
    %15 = math.rsqrt %14 : vector<16x1xf32>
    %16 = vector.broadcast %15 : vector<16x1xf32> to vector<16x32xf32>
    %17 = arith.mulf %7, %16 : vector<16x32xf32>
    %c0_6 = arith.constant 0 : index
    %c0_7 = arith.constant 0 : index
    %18 = vector.load %arg2[%c0_6, %c0_7] : memref<1x32xf32, #tpu.memory_space<vmem>>, vector<1x32xf32>
    %19 = vector.broadcast %18 : vector<1x32xf32> to vector<16x32xf32>
    %20 = arith.mulf %17, %19 : vector<16x32xf32>
    %c0_8 = arith.constant 0 : index
    %c0_9 = arith.constant 0 : index
    %21 = vector.load %arg3[%c0_8, %c0_9] : memref<1x32xf32, #tpu.memory_space<vmem>>, vector<1x32xf32>
    %22 = vector.broadcast %21 : vector<1x32xf32> to vector<16x32xf32>
    %23 = arith.addf %20, %22 : vector<16x32xf32>
    %24 = arith.truncf %23 : vector<16x32xf32> to vector<16x32xbf16>
    %c0_10 = arith.constant 0 : index
    %c0_11 = arith.constant 0 : index
    %25 = vector.load %arg4[%c0_10, %c0_11] : memref<32x96xbf16, #tpu.memory_space<vmem>>, vector<32x96xbf16>
    %cst_12 = arith.constant dense<0.000000e+00> : vector<16x96xf32>
    %26 = tpu.matmul %24, %25, %cst_12 {dimension_numbers = #tpu.dot_dimension_numbers<[1], [0], [0], [1], [0, 0, 1, 1], [], []>} : vector<16x32xbf16>, vector<32x96xbf16>, vector<16x96xf32> -> vector<16x96xf32>
    %27 = vector.extract_strided_slice %26 {offsets = [0, 0], sizes = [16, 16], strides = [1, 1]} : vector<16x96xf32> to vector<16x16xf32>
    %28 = vector.extract_strided_slice %26 {offsets = [0, 32], sizes = [16, 16], strides = [1, 1]} : vector<16x96xf32> to vector<16x16xf32>
    %29 = vector.extract_strided_slice %26 {offsets = [0, 64], sizes = [16, 16], strides = [1, 1]} : vector<16x96xf32> to vector<16x16xf32>
    %30 = vector.shape_cast %27 : vector<16x16xf32> to vector<2x8x16xf32>
    %31 = arith.truncf %30 : vector<2x8x16xf32> to vector<2x8x16xbf16>
    %32 = vector.shape_cast %28 : vector<16x16xf32> to vector<2x8x16xf32>
    %33 = arith.truncf %32 : vector<2x8x16xf32> to vector<2x8x16xbf16>
    %34 = vector.shape_cast %29 : vector<16x16xf32> to vector<2x8x16xf32>
    %35 = arith.truncf %34 : vector<2x8x16xf32> to vector<2x8x16xbf16>
    "tpu.trace_start"() <{level = 10 : i32, message = "bnd,bmd->bnm"}> : () -> ()
    %cst_13 = arith.constant dense<0.000000e+00> : vector<2x8x8xf32>
    %36 = tpu.matmul %31, %33, %cst_13 {dimension_numbers = #tpu.dot_dimension_numbers<[2], [2], [1], [1], [0, 0, 0, 1, 1, 1], [0], [0]>} : vector<2x8x16xbf16>, vector<2x8x16xbf16>, vector<2x8x8xf32> -> vector<2x8x8xf32>
    "tpu.trace_stop"() : () -> ()
    %cst_14 = arith.constant dense<0xFF800000> : vector<2x8xf32>
    %37 = vector.multi_reduction <maximumf>, %36, %cst_14 [2] : vector<2x8x8xf32> to vector<2x8xf32>
    %38 = vector.shape_cast %37 : vector<2x8xf32> to vector<2x8x1xf32>
    %39 = vector.broadcast %38 : vector<2x8x1xf32> to vector<2x8x8xf32>
    %40 = arith.subf %36, %39 : vector<2x8x8xf32>
    %41 = math.exp %40 : vector<2x8x8xf32>
    %cst_15 = arith.constant dense<0.000000e+00> : vector<2x8xf32>
    %42 = vector.multi_reduction <add>, %41, %cst_15 [2] : vector<2x8x8xf32> to vector<2x8xf32>
    %43 = vector.shape_cast %42 : vector<2x8xf32> to vector<2x8x1xf32>
    %44 = tpu.reciprocal %43 {approx = true} : vector<2x8x1xf32> -> vector<2x8x1xf32>
    %45 = vector.broadcast %44 : vector<2x8x1xf32> to vector<2x8x8xf32>
    %46 = arith.mulf %41, %45 : vector<2x8x8xf32>
    %47 = arith.truncf %46 : vector<2x8x8xf32> to vector<2x8x8xbf16>
    "tpu.trace_start"() <{level = 10 : i32, message = "bnm,bmd->bnd"}> : () -> ()
    %cst_16 = arith.constant dense<0.000000e+00> : vector<2x8x16xf32>
    %48 = tpu.matmul %47, %35, %cst_16 {dimension_numbers = #tpu.dot_dimension_numbers<[2], [1], [1], [2], [0, 0, 0, 1, 1, 2], [0], [0]>} : vector<2x8x8xbf16>, vector<2x8x16xbf16>, vector<2x8x16xf32> -> vector<2x8x16xf32>
    "tpu.trace_stop"() : () -> ()
    %49 = vector.extract_strided_slice %26 {offsets = [0, 16], sizes = [16, 16], strides = [1, 1]} : vector<16x96xf32> to vector<16x16xf32>
    %50 = vector.extract_strided_slice %26 {offsets = [0, 48], sizes = [16, 16], strides = [1, 1]} : vector<16x96xf32> to vector<16x16xf32>
    %51 = vector.extract_strided_slice %26 {offsets = [0, 80], sizes = [16, 16], strides = [1, 1]} : vector<16x96xf32> to vector<16x16xf32>
    %52 = vector.shape_cast %49 : vector<16x16xf32> to vector<2x8x16xf32>
    %53 = arith.truncf %52 : vector<2x8x16xf32> to vector<2x8x16xbf16>
    %54 = vector.shape_cast %50 : vector<16x16xf32> to vector<2x8x16xf32>
    %55 = arith.truncf %54 : vector<2x8x16xf32> to vector<2x8x16xbf16>
    %56 = vector.shape_cast %51 : vector<16x16xf32> to vector<2x8x16xf32>
    %57 = arith.truncf %56 : vector<2x8x16xf32> to vector<2x8x16xbf16>
    "tpu.trace_start"() <{level = 10 : i32, message = "bnd,bmd->bnm"}> : () -> ()
    %cst_17 = arith.constant dense<0.000000e+00> : vector<2x8x8xf32>
    %58 = tpu.matmul %53, %55, %cst_17 {dimension_numbers = #tpu.dot_dimension_numbers<[2], [2], [1], [1], [0, 0, 0, 1, 1, 1], [0], [0]>} : vector<2x8x16xbf16>, vector<2x8x16xbf16>, vector<2x8x8xf32> -> vector<2x8x8xf32>
    "tpu.trace_stop"() : () -> ()
    %cst_18 = arith.constant dense<0xFF800000> : vector<2x8xf32>
    %59 = vector.multi_reduction <maximumf>, %58, %cst_18 [2] : vector<2x8x8xf32> to vector<2x8xf32>
    %60 = vector.shape_cast %59 : vector<2x8xf32> to vector<2x8x1xf32>
    %61 = vector.broadcast %60 : vector<2x8x1xf32> to vector<2x8x8xf32>
    %62 = arith.subf %58, %61 : vector<2x8x8xf32>
    %63 = math.exp %62 : vector<2x8x8xf32>
    %cst_19 = arith.constant dense<0.000000e+00> : vector<2x8xf32>
    %64 = vector.multi_reduction <add>, %63, %cst_19 [2] : vector<2x8x8xf32> to vector<2x8xf32>
    %65 = vector.shape_cast %64 : vector<2x8xf32> to vector<2x8x1xf32>
    %66 = tpu.reciprocal %65 {approx = true} : vector<2x8x1xf32> -> vector<2x8x1xf32>
    %67 = vector.broadcast %66 : vector<2x8x1xf32> to vector<2x8x8xf32>
    %68 = arith.mulf %63, %67 : vector<2x8x8xf32>
    %69 = arith.truncf %68 : vector<2x8x8xf32> to vector<2x8x8xbf16>
    "tpu.trace_start"() <{level = 10 : i32, message = "bnm,bmd->bnd"}> : () -> ()
    %cst_20 = arith.constant dense<0.000000e+00> : vector<2x8x16xf32>
    %70 = tpu.matmul %69, %57, %cst_20 {dimension_numbers = #tpu.dot_dimension_numbers<[2], [1], [1], [2], [0, 0, 0, 1, 1, 2], [0], [0]>} : vector<2x8x8xbf16>, vector<2x8x16xbf16>, vector<2x8x16xf32> -> vector<2x8x16xf32>
    "tpu.trace_stop"() : () -> ()
    %71 = tpu.concatenate %48, %70 in 2 : vector<2x8x16xf32>, vector<2x8x16xf32> -> vector<2x8x32xf32>
    %72 = vector.shape_cast %71 : vector<2x8x32xf32> to vector<16x32xf32>
    %73 = arith.truncf %72 : vector<16x32xf32> to vector<16x32xbf16>
    %c0_21 = arith.constant 0 : index
    %c0_22 = arith.constant 0 : index
    %74 = vector.load %arg5[%c0_21, %c0_22] : memref<32x32xbf16, #tpu.memory_space<vmem>>, vector<32x32xbf16>
    %cst_23 = arith.constant dense<0.000000e+00> : vector<16x32xf32>
    %75 = tpu.matmul %73, %74, %cst_23 {dimension_numbers = #tpu.dot_dimension_numbers<[1], [0], [0], [1], [0, 0, 1, 1], [], []>} : vector<16x32xbf16>, vector<32x32xbf16>, vector<16x32xf32> -> vector<16x32xf32>
    %76 = vector.shape_cast %75 : vector<16x32xf32> to vector<2x8x32xf32>
    %c0_24 = arith.constant 0 : index
    %c0_25 = arith.constant 0 : index
    %c0_26 = arith.constant 0 : index
    %77 = vector.load %arg6[%c0_24, %c0_25, %c0_26] : memref<2x8x32xf32, #tpu.memory_space<vmem>>, vector<2x8x32xf32>
    tpu.vector_store %arg6[%c0_24, %c0_25, %c0_26], %76 {strides = array<i32>} : memref<2x8x32xf32, #tpu.memory_space<vmem>>, vector<2x8x32xf32>,
    return
  }
  func.func @transform_0(%arg0: i32) -> (i32, i32, i32) {
    %c0_i32 = arith.constant 0 : i32
    %c0_i32_0 = arith.constant 0 : i32
    %c0_i32_1 = arith.constant 0 : i32
    return %arg0, %c0_i32, %c0_i32_0 : i32, i32, i32
  }
  func.func @transform_1(%arg0: i32) -> (i32, i32) {
    %c0_i32 = arith.constant 0 : i32
    %c0_i32_0 = arith.constant 0 : i32
    %c0_i32_1 = arith.constant 0 : i32
    return %c0_i32, %c0_i32_0 : i32, i32
  }
  func.func @transform_2(%arg0: i32) -> (i32, i32) {
    %c0_i32 = arith.constant 0 : i32
    %c0_i32_0 = arith.constant 0 : i32
    %c0_i32_1 = arith.constant 0 : i32
    return %c0_i32, %c0_i32_0 : i32, i32
  }
  func.func @transform_3(%arg0: i32) -> (i32, i32) {
    %c0_i32 = arith.constant 0 : i32
    %c0_i32_0 = arith.constant 0 : i32
    %c0_i32_1 = arith.constant 0 : i32
    return %c0_i32, %c0_i32_0 : i32, i32
  }
  func.func @transform_4(%arg0: i32) -> (i32, i32) {
    %c0_i32 = arith.constant 0 : i32
    %c0_i32_0 = arith.constant 0 : i32
    %c0_i32_1 = arith.constant 0 : i32
    return %c0_i32, %c0_i32_0 : i32, i32
  }
  func.func @transform_5(%arg0: i32) -> (i32, i32, i32) {
    %c0_i32 = arith.constant 0 : i32
    %c0_i32_0 = arith.constant 0 : i32
    %c0_i32_1 = arith.constant 0 : i32
    return %arg0, %c0_i32, %c0_i32_0 : i32, i32, i32
  }
}

</mosaic_0001>

<llo_original>
// kernel: tpu_custom_call.1
$region0: #{tpu_custom_call.1}
  #allocation0 [shape = 'u32[]', space=smem, size = 0x4, offset = 0x4, fixed_abs, tag = 'smem constant byte address 0x4 - core index']
  #allocation1 [shape = 'u32[144,128]{1,0:T(1,128)}', space=vmem, size = 0x12000, scoped, tag = 'internal scratch']
  %s0 = inlined_call_operand.hbm [shape: f32[2,8,32], index: 0, kind: input, shape index: {}]
  %s1 = inlined_call_operand.vmem [shape: f32[1,32], index: 1, kind: input, shape index: {}]
  %s2 = inlined_call_operand.vmem [shape: f32[1,32], index: 2, kind: input, shape index: {}]
  %s3 = inlined_call_operand.hbm [shape: bf16[32,96], index: 3, kind: input, shape index: {}]
  %s4 = inlined_call_operand.hbm [shape: bf16[32,32], index: 4, kind: input, shape index: {}]
  %s5 = inlined_call_operand.hbm [shape: f32[2,8,32], index: 5, kind: output, shape index: {}]
  %s6 = sld [smem:[#allocation0]]
  $region42: #{tpu_custom_call.1} parent=0
    _
  %s8 = ssub.s32 1, %s6
  %s9 = scalar_select 0, %s8, %s6
  $region1: #{tpu_custom_call.1} parent=0
    #allocation2 [shape = 'u8[8192]{0}', space=vmem, size = 0x2000, scoped, tag = 'input window, operand 0, single buffered']
    #allocation3 [shape = 's32[1]{0}', space=sflag, size = 0x4, scoped, tag = 'scoped memory for tpu_custom_call.1']
    #allocation4 [shape = 's32[1]{0}', space=sflag, size = 0x4, scoped, tag = 'scoped memory for tpu_custom_call.1']
    #allocation5 [shape = 'u8[8192]{0}', space=vmem, size = 0x2000, scoped, tag = 'input window, operand 3, single buffered']
    #allocation6 [shape = 's32[1]{0}', space=sflag, size = 0x4, scoped, tag = 'scoped memory for tpu_custom_call.1']
    #allocation7 [shape = 'u8[8192]{0}', space=vmem, size = 0x2000, scoped, tag = 'input window, operand 4, single buffered']
    #allocation8 [shape = 'u8[8192]{0}', space=vmem, size = 0x2000, scoped, tag = 'output window, operand 0, single buffered']
    %10 = vsyncpa [#allocation3], 0
    %11 = vsyncpa [#allocation6], 0
    %12 = vsyncpa [#allocation4], 0
    // Predicated region
    $region2: #{tpu_custom_call.1} parent=1 // pred_check
      _
    $region3: #{tpu_custom_call.1} parent=1 // pred_check_branch
      %14 = sbr.rel (0) target = $region5
    $region4: #{tpu_custom_call.1} parent=1 // pred_region
      %s16 = ssub.s32 256, 256
      %17 = vsyncadd [#allocation3], %s16
      %s18 = sshll.u32 [#allocation2], 4
      %s19 = int_to_ptr.vmem [resolvable:$true] %s18
      %24 = dma.hbm_to_vmem [thread:$0]  %s0, 256, %s19, [#allocation3], 128, 128, 8
    $region5: #{tpu_custom_call.1} parent=1 // pred_fallthru
      _
    // Predicated region
    $region6: #{tpu_custom_call.1} parent=1 // pred_check
      _
    $region7: #{tpu_custom_call.1} parent=1 // pred_check_branch
      %26 = sbr.rel (0) target = $region9
    $region8: #{tpu_custom_call.1} parent=1 // pred_region
      _
    $region9: #{tpu_custom_call.1} parent=1 // pred_fallthru
      _
    // Predicated region
    $region10: #{tpu_custom_call.1} parent=1 // pred_check
      _
    $region11: #{tpu_custom_call.1} parent=1 // pred_check_branch
      %28 = sbr.rel (0) target = $region13
    $region12: #{tpu_custom_call.1} parent=1 // pred_region
      _
    $region13: #{tpu_custom_call.1} parent=1 // pred_fallthru
      _
    // Predicated region
    $region14: #{tpu_custom_call.1} parent=1 // pred_check
      _
    $region15: #{tpu_custom_call.1} parent=1 // pred_check_branch
      %30 = sbr.rel (0) target = $region17
    $region16: #{tpu_custom_call.1} parent=1 // pred_region
      %s32 = ssub.s32 256, 256
      %33 = vsyncadd [#allocation6], %s32
      %s34 = sshll.u32 [#allocation5], 4
      %s35 = int_to_ptr.vmem [resolvable:$true] %s34
      %40 = dma.hbm_to_vmem [thread:$0]  %s3, 256, %s35, [#allocation6], 64, 64, 4
    $region17: #{tpu_custom_call.1} parent=1 // pred_fallthru
      _
    // Predicated region
    $region18: #{tpu_custom_call.1} parent=1 // pred_check
      _
    $region19: #{tpu_custom_call.1} parent=1 // pred_check_branch
      %42 = sbr.rel (0) target = $region21
    $region20: #{tpu_custom_call.1} parent=1 // pred_region
      %s44 = ssub.s32 256, 256
      %45 = vsyncadd [#allocation6], %s44
      %s46 = sshll.u32 [#allocation7], 4
      %s47 = int_to_ptr.vmem [resolvable:$true] %s46
      %52 = dma.hbm_to_vmem [thread:$0]  %s4, 256, %s47, [#allocation6], 64, 64, 4
    $region21: #{tpu_custom_call.1} parent=1 // pred_fallthru
      _
    // Predicated region
    $region22: #{tpu_custom_call.1} parent=1 // pred_check
      _
    $region23: #{tpu_custom_call.1} parent=1 // pred_check_branch
      %54 = sbr.rel (0) target = $region25
    $region24: #{tpu_custom_call.1} parent=1 // pred_region
      %55 = dma.done [#allocation3], 256
    $region25: #{tpu_custom_call.1} parent=1 // pred_fallthru
      _
    // Predicated region
    $region26: #{tpu_custom_call.1} parent=1 // pred_check
      _
    $region27: #{tpu_custom_call.1} parent=1 // pred_check_branch
      %57 = sbr.rel (0) target = $region29
    $region28: #{tpu_custom_call.1} parent=1 // pred_region
      %58 = dma.done [#allocation6], 256
    $region29: #{tpu_custom_call.1} parent=1 // pred_fallthru
      _
    // Predicated region
    $region30: #{tpu_custom_call.1} parent=1 // pred_check
      _
    $region31: #{tpu_custom_call.1} parent=1 // pred_check_branch
      %60 = sbr.rel (0) target = $region33
    $region32: #{tpu_custom_call.1} parent=1 // pred_region
      %61 = dma.done [#allocation6], 256
    $region33: #{tpu_custom_call.1} parent=1 // pred_fallthru
      _
    %v63 = vld [vmem:[#allocation2] sm:$0xff]
    %v64 = vld [vmem:[#allocation2 + $0x8] sm:$0xff]
    %vm65 = vcmask 261120
    %v66 = vsel %vm65, %v63, 0.0
    %67 = vadd.xlane.f32.xlu0 %v66
    %v68 = vpop.xlane.xlu0 %67
    %v69 = vsel %vm65, %v64, 0.0
    %70 = vadd.xlane.f32.xlu0 %v69
    %v71 = vpop.xlane.xlu0 %70
    %v72 = vrcp.pop 32.0
    %v73 = vmul.f32 %v68, %v72
    %v74 = vmul.f32 %v71, %v72
    %v75 = vsub.f32 %v63, %v73
    %v76 = vsub.f32 %v64, %v74
    %v77 = vmul.f32 %v75, %v75
    %v78 = vmul.f32 %v76, %v76
    %v79 = vsel %vm65, %v77, 0.0
    %80 = vadd.xlane.f32.xlu0 %v79
    %v81 = vpop.xlane.xlu0 %80
    %v82 = vsel %vm65, %v78, 0.0
    %83 = vadd.xlane.f32.xlu0 %v82
    %v84 = vpop.xlane.xlu0 %83
    %v85 = vmul.f32 %v81, %v72
    %v86 = vmul.f32 %v84, %v72
    %v87 = vadd.f32 %v85, 1e-05
    %v88 = vadd.f32 %v86, 1e-05
    %v89 = vrsqrt.pop %v87
    %v90 = vrsqrt.pop %v88
    %v91 = vmul.f32 %v75, %v89
    %v92 = vmul.f32 %v76, %v90
    %v93 = vld [vmem:[%s1] sm:$0x1]
    %v95 = vlaneseq
    %v96 = vshrl.u32 %v95, 7
    %v97 = vsub.s32 0, %v96
    %v98 = vrot.slane %v93, %v97
    %v100 = vmul.f32 %v91, %v98
    %v101 = vmul.f32 %v92, %v98
    %v102 = vld [vmem:[%s2] sm:$0x1]
    %v104 = vlaneseq
    %v105 = vshrl.u32 %v104, 7
    %v106 = vsub.s32 0, %v105
    %v107 = vrot.slane %v102, %v106
    %v109 = vadd.f32 %v100, %v107
    %v110 = vadd.f32 %v101, %v107
    %v111 = vpack.c.bf16 %v110, %v109
    %v112 = vld [vmem:[#allocation5] sm:$0xf]
    %v113 = vld [vmem:[#allocation5 + $0x4] sm:$0xf]
    %v114 = vld [vmem:[#allocation5 + $0x8] sm:$0xf]
    %v115 = vld [vmem:[#allocation5 + $0xc] sm:$0xf]
    %v120 = vunpack.c.l.b16 %v112
    %v121 = vunpack.c.l.b16 %v113
    %v122 = vunpack.c.l.b16 %v114
    %v123 = vunpack.c.l.b16 %v115
    %v124 = vpack.c.b16 %v121, %v120
    %v125 = vpack.c.b16 %v123, %v122
    %v129 = vsel %vm65, %v111, 0
    %131 = vmatprep.subr.bf16.mxu0 0
    %132 = vmatpush1.bf16.msra.mxu0 0
    %133 = vmatprep.subr.bf16.mxu0 0
    %134 = vmatpush1.bf16.msra.mxu0 0
    %135 = vmatprep.subr.bf16.mxu0 0
    %136 = vmatpush1.bf16.msra.mxu0 0
    %137 = vmatprep.subr.bf16.mxu0 0
    %138 = vmatpush1.bf16.msra.mxu0 0
    %139 = vmatprep.subr.bf16.mxu0 0
    %140 = vmatpush1.bf16.msra.mxu0 0
    %141 = vmatprep.subr.bf16.mxu0 0
    %142 = vmatpush1.bf16.msra.mxu0 0
    %143 = vmatprep.subr.bf16.mxu0 0
    %144 = vmatpush1.bf16.msra.mxu0 %v125
    %145 = vmatprep.subr.bf16.mxu0 0
    %146 = vmatpush1.bf16.msra.mxu0 %v124
    %147 = vmatprep.subr.bf16.mxu0 0
    %148 = vmatpush2.bf16.msra.mxu0 0
    %149 = vmatprep.subr.bf16.mxu0 0
    %150 = vmatpush2.bf16.msra.mxu0 0
    %151 = vmatprep.subr.bf16.mxu0 0
    %152 = vmatpush2.bf16.msra.mxu0 0
    %153 = vmatprep.subr.bf16.mxu0 0
    %154 = vmatpush2.bf16.msra.mxu0 0
    %155 = vmatprep.subr.bf16.mxu0 0
    %156 = vmatpush2.bf16.msra.mxu0 0
    %157 = vmatprep.subr.bf16.mxu0 0
    %158 = vmatpush2.bf16.msra.mxu0 0
    %159 = vmatprep.subr.bf16.mxu0 0
    %160 = vmatpush2.bf16.msra.mxu0 0
    %161 = vmatprep.subr.bf16.mxu0 0
    %162 = vmatpush2.bf16.msra.mxu0 0
    %163 = vmatprep.mubr.bf16.mxu0 0
    %164 = vmatmul.mubr.bf16.gmra.mxu0 %v129
    %v165 = vpop.f32.mrf.mxu0
    %v166 = vadd.f32 0.0, %v165
    %v167 = vpop.f32.mrf.mxu0
    %v168 = vpop.f32.mrf.mxu0
    %v169 = vadd.f32 0.0, %v168
    %v170 = vpop.f32.mrf.mxu0
    %171 = vdwg.mxu0
    %v172 = vpack.c.bf16 %v166, %v166
    %v173 = vpack.c.bf16 %v169, %v169
    %175 = vrot.lane.b32.xlu0 %v172, 96
    %v176 = vpop.permute.xlu0 %175
    %vm177 = vcmask 130048
    %v179 = vsel %vm177, %v172, 0
    %v182 = vsel %vm177, %v176, 0
    %184 = vmatprep.subr.bf16.mxu0 0
    %185 = vmatpush1.bf16.xpose.msra.mxu0 0
    %186 = vmatprep.subr.bf16.mxu0 0
    %187 = vmatpush1.bf16.xpose.msra.mxu0 0
    %188 = vmatprep.subr.bf16.mxu0 0
    %189 = vmatpush1.bf16.xpose.msra.mxu0 0
    %190 = vmatprep.subr.bf16.mxu0 0
    %191 = vmatpush1.bf16.xpose.msra.mxu0 0
    %192 = vmatprep.subr.bf16.mxu0 0
    %193 = vmatpush1.bf16.xpose.msra.mxu0 0
    %194 = vmatprep.subr.bf16.mxu0 0
    %195 = vmatpush1.bf16.xpose.msra.mxu0 0
    %196 = vmatprep.subr.bf16.mxu0 0
    %197 = vmatpush1.bf16.xpose.msra.mxu0 0
    %198 = vmatprep.subr.bf16.mxu0 0
    %199 = vmatpush1.bf16.xpose.msra.mxu0 %v182
    %200 = vmatprep.subr.bf16.mxu0 0
    %201 = vmatpush2.bf16.xpose.msra.mxu0 0
    %202 = vmatprep.subr.bf16.mxu0 0
    %203 = vmatpush2.bf16.xpose.msra.mxu0 0
    %204 = vmatprep.subr.bf16.mxu0 0
    %205 = vmatpush2.bf16.xpose.msra.mxu0 0
    %206 = vmatprep.subr.bf16.mxu0 0
    %207 = vmatpush2.bf16.xpose.msra.mxu0 0
    %208 = vmatprep.subr.bf16.mxu0 0
    %209 = vmatpush2.bf16.xpose.msra.mxu0 0
    %210 = vmatprep.subr.bf16.mxu0 0
    %211 = vmatpush2.bf16.xpose.msra.mxu0 0
    %212 = vmatprep.subr.bf16.mxu0 0
    %213 = vmatpush2.bf16.xpose.msra.mxu0 0
    %214 = vmatprep.subr.bf16.mxu0 0
    %215 = vmatpush2.bf16.xpose.msra.mxu0 0
    %216 = vmatprep.mubr.bf16.mxu0 0
    %217 = vmatmul.mubr.bf16.gmra.mxu0 %v179
    %v218 = vpop.f32.mrf.mxu0
    %v219 = vadd.f32 0.0, %v218
    %v220 = vpop.f32.mrf.mxu0
    %v221 = vpop.f32.mrf.mxu0
    %v222 = vpop.f32.mrf.mxu0
    %223 = vdwg.mxu0
    %225 = vrot.lane.b32.xlu0 %v173, 96
    %v226 = vpop.permute.xlu0 %225
    %v228 = vsel %vm177, %v173, 0
    %v231 = vsel %vm177, %v226, 0
    %233 = vmatprep.subr.bf16.mxu0 0
    %234 = vmatpush1.bf16.xpose.msra.mxu0 0
    %235 = vmatprep.subr.bf16.mxu0 0
    %236 = vmatpush1.bf16.xpose.msra.mxu0 0
    %237 = vmatprep.subr.bf16.mxu0 0
    %238 = vmatpush1.bf16.xpose.msra.mxu0 0
    %239 = vmatprep.subr.bf16.mxu0 0
    %240 = vmatpush1.bf16.xpose.msra.mxu0 0
    %241 = vmatprep.subr.bf16.mxu0 0
    %242 = vmatpush1.bf16.xpose.msra.mxu0 0
    %243 = vmatprep.subr.bf16.mxu0 0
    %244 = vmatpush1.bf16.xpose.msra.mxu0 0
    %245 = vmatprep.subr.bf16.mxu0 0
    %246 = vmatpush1.bf16.xpose.msra.mxu0 0
    %247 = vmatprep.subr.bf16.mxu0 0
    %248 = vmatpush1.bf16.xpose.msra.mxu0 %v231
    %249 = vmatprep.subr.bf16.mxu0 0
    %250 = vmatpush2.bf16.xpose.msra.mxu0 0
    %251 = vmatprep.subr.bf16.mxu0 0
    %252 = vmatpush2.bf16.xpose.msra.mxu0 0
    %253 = vmatprep.subr.bf16.mxu0 0
    %254 = vmatpush2.bf16.xpose.msra.mxu0 0
    %255 = vmatprep.subr.bf16.mxu0 0
    %256 = vmatpush2.bf16.xpose.msra.mxu0 0
    %257 = vmatprep.subr.bf16.mxu0 0
    %258 = vmatpush2.bf16.xpose.msra.mxu0 0
    %259 = vmatprep.subr.bf16.mxu0 0
    %260 = vmatpush2.bf16.xpose.msra.mxu0 0
    %261 = vmatprep.subr.bf16.mxu0 0
    %262 = vmatpush2.bf16.xpose.msra.mxu0 0
    %263 = vmatprep.subr.bf16.mxu0 0
    %264 = vmatpush2.bf16.xpose.msra.mxu0 0
    %265 = vmatprep.mubr.bf16.mxu0 0
    %266 = vmatmul.mubr.bf16.gmra.mxu0 %v228
    %v267 = vpop.f32.mrf.mxu0
    %v268 = vadd.f32 0.0, %v267
    %v269 = vpop.f32.mrf.mxu0
    %v270 = vpop.f32.mrf.mxu0
    %v271 = vpop.f32.mrf.mxu0
    %272 = vdwg.mxu0
    %vm273 = vcmask 64512
    %v274 = vsel %vm273, %v219, -inf
    %275 = vmax.xlane.f32.xlu0 %v274
    %v276 = vpop.xlane.xlu0 %275
    %v277 = vsel %vm273, %v268, -inf
    %278 = vmax.xlane.f32.xlu0 %v277
    %v279 = vpop.xlane.xlu0 %278
    %v280 = vsub.f32 %v219, %v276
    %v281 = vsub.f32 %v268, %v279
    %v282 = vmul.f32 %v280, 1.442695
    %v283 = vpow.pop %v282
    %v284 = vmul.f32 %v281, 1.442695
    %v285 = vpow.pop %v284
    %v286 = vsel %vm273, %v283, 0.0
    %287 = vadd.xlane.f32.xlu0 %v286
    %v288 = vpop.xlane.xlu0 %287
    %v289 = vsel %vm273, %v285, 0.0
    %290 = vadd.xlane.f32.xlu0 %v289
    %v291 = vpop.xlane.xlu0 %290
    %v292 = vrcp.pop %v288
    %v293 = vrcp.pop %v291
    %v294 = vmul.f32 %v283, %v292
    %v295 = vmul.f32 %v285, %v293
    %v296 = vpack.c.bf16 %v294, %v294
    %v297 = vpack.c.bf16 %v295, %v295
    %298 = vrot.lane.b32.xlu0 %v172, 64
    %v299 = vpop.permute.xlu0 %298
    %v301 = vsel %vm273, %v296, 0
    %vm303 = vcmask 1043456
    %v305 = vsel %vm303, %v299, 0
    %307 = vmatprep.subr.bf16.mxu0 0
    %308 = vmatpush1.bf16.msra.mxu0 0
    %309 = vmatprep.subr.bf16.mxu0 0
    %310 = vmatpush1.bf16.msra.mxu0 0
    %311 = vmatprep.subr.bf16.mxu0 0
    %312 = vmatpush1.bf16.msra.mxu0 0
    %313 = vmatprep.subr.bf16.mxu0 0
    %314 = vmatpush1.bf16.msra.mxu0 0
    %315 = vmatprep.subr.bf16.mxu0 0
    %316 = vmatpush1.bf16.msra.mxu0 0
    %317 = vmatprep.subr.bf16.mxu0 0
    %318 = vmatpush1.bf16.msra.mxu0 0
    %319 = vmatprep.subr.bf16.mxu0 0
    %320 = vmatpush1.bf16.msra.mxu0 0
    %321 = vmatprep.subr.bf16.mxu0 0
    %322 = vmatpush1.bf16.msra.mxu0 %v305
    %323 = vmatprep.subr.bf16.mxu0 0
    %324 = vmatpush2.bf16.msra.mxu0 0
    %325 = vmatprep.subr.bf16.mxu0 0
    %326 = vmatpush2.bf16.msra.mxu0 0
    %327 = vmatprep.subr.bf16.mxu0 0
    %328 = vmatpush2.bf16.msra.mxu0 0
    %329 = vmatprep.subr.bf16.mxu0 0
    %330 = vmatpush2.bf16.msra.mxu0 0
    %331 = vmatprep.subr.bf16.mxu0 0
    %332 = vmatpush2.bf16.msra.mxu0 0
    %333 = vmatprep.subr.bf16.mxu0 0
    %334 = vmatpush2.bf16.msra.mxu0 0
    %335 = vmatprep.subr.bf16.mxu0 0
    %336 = vmatpush2.bf16.msra.mxu0 0
    %337 = vmatprep.subr.bf16.mxu0 0
    %338 = vmatpush2.bf16.msra.mxu0 0
    %339 = vmatprep.mubr.bf16.mxu0 0
    %340 = vmatmul.mubr.bf16.gmra.mxu0 %v301
    %v341 = vpop.f32.mrf.mxu0
    %v342 = vadd.f32 0.0, %v341
    %v343 = vpop.f32.mrf.mxu0
    %v344 = vpop.f32.mrf.mxu0
    %v345 = vpop.f32.mrf.mxu0
    %346 = vdwg.mxu0
    %347 = vrot.lane.b32.xlu0 %v173, 64
    %v348 = vpop.permute.xlu0 %347
    %v350 = vsel %vm273, %v297, 0
    %v353 = vsel %vm303, %v348, 0
    %355 = vmatprep.subr.bf16.mxu0 0
    %356 = vmatpush1.bf16.msra.mxu0 0
    %357 = vmatprep.subr.bf16.mxu0 0
    %358 = vmatpush1.bf16.msra.mxu0 0
    %359 = vmatprep.subr.bf16.mxu0 0
    %360 = vmatpush1.bf16.msra.mxu0 0
    %361 = vmatprep.subr.bf16.mxu0 0
    %362 = vmatpush1.bf16.msra.mxu0 0
    %363 = vmatprep.subr.bf16.mxu0 0
    %364 = vmatpush1.bf16.msra.mxu0 0
    %365 = vmatprep.subr.bf16.mxu0 0
    %366 = vmatpush1.bf16.msra.mxu0 0
    %367 = vmatprep.subr.bf16.mxu0 0
    %368 = vmatpush1.bf16.msra.mxu0 0
    %369 = vmatprep.subr.bf16.mxu0 0
    %370 = vmatpush1.bf16.msra.mxu0 %v353
    %371 = vmatprep.subr.bf16.mxu0 0
    %372 = vmatpush2.bf16.msra.mxu0 0
    %373 = vmatprep.subr.bf16.mxu0 0
    %374 = vmatpush2.bf16.msra.mxu0 0
    %375 = vmatprep.subr.bf16.mxu0 0
    %376 = vmatpush2.bf16.msra.mxu0 0
    %377 = vmatprep.subr.bf16.mxu0 0
    %378 = vmatpush2.bf16.msra.mxu0 0
    %379 = vmatprep.subr.bf16.mxu0 0
    %380 = vmatpush2.bf16.msra.mxu0 0
    %381 = vmatprep.subr.bf16.mxu0 0
    %382 = vmatpush2.bf16.msra.mxu0 0
    %383 = vmatprep.subr.bf16.mxu0 0
    %384 = vmatpush2.bf16.msra.mxu0 0
    %385 = vmatprep.subr.bf16.mxu0 0
    %386 = vmatpush2.bf16.msra.mxu0 0
    %387 = vmatprep.mubr.bf16.mxu0 0
    %388 = vmatmul.mubr.bf16.gmra.mxu0 %v350
    %v389 = vpop.f32.mrf.mxu0
    %v390 = vadd.f32 0.0, %v389
    %v391 = vpop.f32.mrf.mxu0
    %v392 = vpop.f32.mrf.mxu0
    %v393 = vpop.f32.mrf.mxu0
    %394 = vdwg.mxu0
    %395 = vrot.lane.b32.xlu0 %v172, 112
    %v396 = vpop.permute.xlu0 %395
    %397 = vrot.lane.b32.xlu0 %v172, 80
    %v398 = vpop.permute.xlu0 %397
    %v400 = vsel %vm177, %v396, 0
    %v403 = vsel %vm177, %v398, 0
    %405 = vmatprep.subr.bf16.mxu0 0
    %406 = vmatpush1.bf16.xpose.msra.mxu0 0
    %407 = vmatprep.subr.bf16.mxu0 0
    %408 = vmatpush1.bf16.xpose.msra.mxu0 0
    %409 = vmatprep.subr.bf16.mxu0 0
    %410 = vmatpush1.bf16.xpose.msra.mxu0 0
    %411 = vmatprep.subr.bf16.mxu0 0
    %412 = vmatpush1.bf16.xpose.msra.mxu0 0
    %413 = vmatprep.subr.bf16.mxu0 0
    %414 = vmatpush1.bf16.xpose.msra.mxu0 0
    %415 = vmatprep.subr.bf16.mxu0 0
    %416 = vmatpush1.bf16.xpose.msra.mxu0 0
    %417 = vmatprep.subr.bf16.mxu0 0
    %418 = vmatpush1.bf16.xpose.msra.mxu0 0
    %419 = vmatprep.subr.bf16.mxu0 0
    %420 = vmatpush1.bf16.xpose.msra.mxu0 %v403
    %421 = vmatprep.subr.bf16.mxu0 0
    %422 = vmatpush2.bf16.xpose.msra.mxu0 0
    %423 = vmatprep.subr.bf16.mxu0 0
    %424 = vmatpush2.bf16.xpose.msra.mxu0 0
    %425 = vmatprep.subr.bf16.mxu0 0
    %426 = vmatpush2.bf16.xpose.msra.mxu0 0
    %427 = vmatprep.subr.bf16.mxu0 0
    %428 = vmatpush2.bf16.xpose.msra.mxu0 0
    %429 = vmatprep.subr.bf16.mxu0 0
    %430 = vmatpush2.bf16.xpose.msra.mxu0 0
    %431 = vmatprep.subr.bf16.mxu0 0
    %432 = vmatpush2.bf16.xpose.msra.mxu0 0
    %433 = vmatprep.subr.bf16.mxu0 0
    %434 = vmatpush2.bf16.xpose.msra.mxu0 0
    %435 = vmatprep.subr.bf16.mxu0 0
    %436 = vmatpush2.bf16.xpose.msra.mxu0 0
    %437 = vmatprep.mubr.bf16.mxu0 0
    %438 = vmatmul.mubr.bf16.gmra.mxu0 %v400
    %v439 = vpop.f32.mrf.mxu0
    %v440 = vadd.f32 0.0, %v439
    %v441 = vpop.f32.mrf.mxu0
    %v442 = vpop.f32.mrf.mxu0
    %v443 = vpop.f32.mrf.mxu0
    %444 = vdwg.mxu0
    %445 = vrot.lane.b32.xlu0 %v173, 112
    %v446 = vpop.permute.xlu0 %445
    %447 = vrot.lane.b32.xlu0 %v173, 80
    %v448 = vpop.permute.xlu0 %447
    %v450 = vsel %vm177, %v446, 0
    %v453 = vsel %vm177, %v448, 0
    %455 = vmatprep.subr.bf16.mxu0 0
    %456 = vmatpush1.bf16.xpose.msra.mxu0 0
    %457 = vmatprep.subr.bf16.mxu0 0
    %458 = vmatpush1.bf16.xpose.msra.mxu0 0
    %459 = vmatprep.subr.bf16.mxu0 0
    %460 = vmatpush1.bf16.xpose.msra.mxu0 0
    %461 = vmatprep.subr.bf16.mxu0 0
    %462 = vmatpush1.bf16.xpose.msra.mxu0 0
    %463 = vmatprep.subr.bf16.mxu0 0
    %464 = vmatpush1.bf16.xpose.msra.mxu0 0
    %465 = vmatprep.subr.bf16.mxu0 0
    %466 = vmatpush1.bf16.xpose.msra.mxu0 0
    %467 = vmatprep.subr.bf16.mxu0 0
    %468 = vmatpush1.bf16.xpose.msra.mxu0 0
    %469 = vmatprep.subr.bf16.mxu0 0
    %470 = vmatpush1.bf16.xpose.msra.mxu0 %v453
    %471 = vmatprep.subr.bf16.mxu0 0
    %472 = vmatpush2.bf16.xpose.msra.mxu0 0
    %473 = vmatprep.subr.bf16.mxu0 0
    %474 = vmatpush2.bf16.xpose.msra.mxu0 0
    %475 = vmatprep.subr.bf16.mxu0 0
    %476 = vmatpush2.bf16.xpose.msra.mxu0 0
    %477 = vmatprep.subr.bf16.mxu0 0
    %478 = vmatpush2.bf16.xpose.msra.mxu0 0
    %479 = vmatprep.subr.bf16.mxu0 0
    %480 = vmatpush2.bf16.xpose.msra.mxu0 0
    %481 = vmatprep.subr.bf16.mxu0 0
    %482 = vmatpush2.bf16.xpose.msra.mxu0 0
    %483 = vmatprep.subr.bf16.mxu0 0
    %484 = vmatpush2.bf16.xpose.msra.mxu0 0
    %485 = vmatprep.subr.bf16.mxu0 0
    %486 = vmatpush2.bf16.xpose.msra.mxu0 0
    %487 = vmatprep.mubr.bf16.mxu0 0
    %488 = vmatmul.mubr.bf16.gmra.mxu0 %v450
    %v489 = vpop.f32.mrf.mxu0
    %v490 = vadd.f32 0.0, %v489
    %v491 = vpop.f32.mrf.mxu0
    %v492 = vpop.f32.mrf.mxu0
    %v493 = vpop.f32.mrf.mxu0
    %494 = vdwg.mxu0
    %v495 = vsel %vm273, %v440, -inf
    %496 = vmax.xlane.f32.xlu0 %v495
    %v497 = vpop.xlane.xlu0 %496
    %v498 = vsel %vm273, %v490, -inf
    %499 = vmax.xlane.f32.xlu0 %v498
    %v500 = vpop.xlane.xlu0 %499
    %v501 = vsub.f32 %v440, %v497
    %v502 = vsub.f32 %v490, %v500
    %v503 = vmul.f32 %v501, 1.442695
    %v504 = vpow.pop %v503
    %v505 = vmul.f32 %v502, 1.442695
    %v506 = vpow.pop %v505
    %v507 = vsel %vm273, %v504, 0.0
    %508 = vadd.xlane.f32.xlu0 %v507
    %v509 = vpop.xlane.xlu0 %508
    %v510 = vsel %vm273, %v506, 0.0
    %511 = vadd.xlane.f32.xlu0 %v510
    %v512 = vpop.xlane.xlu0 %511
    %v513 = vrcp.pop %v509
    %v514 = vrcp.pop %v512
    %v515 = vmul.f32 %v504, %v513
    %v516 = vmul.f32 %v506, %v514
    %v517 = vpack.c.bf16 %v515, %v515
    %v518 = vpack.c.bf16 %v516, %v516
    %519 = vrot.lane.b32.xlu0 %v172, 48
    %v520 = vpop.permute.xlu0 %519
    %v522 = vsel %vm273, %v517, 0
    %v525 = vsel %vm303, %v520, 0
    %527 = vmatprep.subr.bf16.mxu0 0
    %528 = vmatpush1.bf16.msra.mxu0 0
    %529 = vmatprep.subr.bf16.mxu0 0
    %530 = vmatpush1.bf16.msra.mxu0 0
    %531 = vmatprep.subr.bf16.mxu0 0
    %532 = vmatpush1.bf16.msra.mxu0 0
    %533 = vmatprep.subr.bf16.mxu0 0
    %534 = vmatpush1.bf16.msra.mxu0 0
    %535 = vmatprep.subr.bf16.mxu0 0
    %536 = vmatpush1.bf16.msra.mxu0 0
    %537 = vmatprep.subr.bf16.mxu0 0
    %538 = vmatpush1.bf16.msra.mxu0 0
    %539 = vmatprep.subr.bf16.mxu0 0
    %540 = vmatpush1.bf16.msra.mxu0 0
    %541 = vmatprep.subr.bf16.mxu0 0
    %542 = vmatpush1.bf16.msra.mxu0 %v525
    %543 = vmatprep.subr.bf16.mxu0 0
    %544 = vmatpush2.bf16.msra.mxu0 0
    %545 = vmatprep.subr.bf16.mxu0 0
    %546 = vmatpush2.bf16.msra.mxu0 0
    %547 = vmatprep.subr.bf16.mxu0 0
    %548 = vmatpush2.bf16.msra.mxu0 0
    %549 = vmatprep.subr.bf16.mxu0 0
    %550 = vmatpush2.bf16.msra.mxu0 0
    %551 = vmatprep.subr.bf16.mxu0 0
    %552 = vmatpush2.bf16.msra.mxu0 0
    %553 = vmatprep.subr.bf16.mxu0 0
    %554 = vmatpush2.bf16.msra.mxu0 0
    %555 = vmatprep.subr.bf16.mxu0 0
    %556 = vmatpush2.bf16.msra.mxu0 0
    %557 = vmatprep.subr.bf16.mxu0 0
    %558 = vmatpush2.bf16.msra.mxu0 0
    %559 = vmatprep.mubr.bf16.mxu0 0
    %560 = vmatmul.mubr.bf16.gmra.mxu0 %v522
    %v561 = vpop.f32.mrf.mxu0
    %v562 = vadd.f32 0.0, %v561
    %v563 = vpop.f32.mrf.mxu0
    %v564 = vpop.f32.mrf.mxu0
    %v565 = vpop.f32.mrf.mxu0
    %566 = vdwg.mxu0
    %567 = vrot.lane.b32.xlu0 %v173, 48
    %v568 = vpop.permute.xlu0 %567
    %v570 = vsel %vm273, %v518, 0
    %v573 = vsel %vm303, %v568, 0
    %575 = vmatprep.subr.bf16.mxu0 0
    %576 = vmatpush1.bf16.msra.mxu0 0
    %577 = vmatprep.subr.bf16.mxu0 0
    %578 = vmatpush1.bf16.msra.mxu0 0
    %579 = vmatprep.subr.bf16.mxu0 0
    %580 = vmatpush1.bf16.msra.mxu0 0
    %581 = vmatprep.subr.bf16.mxu0 0
    %582 = vmatpush1.bf16.msra.mxu0 0
    %583 = vmatprep.subr.bf16.mxu0 0
    %584 = vmatpush1.bf16.msra.mxu0 0
    %585 = vmatprep.subr.bf16.mxu0 0
    %586 = vmatpush1.bf16.msra.mxu0 0
    %587 = vmatprep.subr.bf16.mxu0 0
    %588 = vmatpush1.bf16.msra.mxu0 0
    %589 = vmatprep.subr.bf16.mxu0 0
    %590 = vmatpush1.bf16.msra.mxu0 %v573
    %591 = vmatprep.subr.bf16.mxu0 0
    %592 = vmatpush2.bf16.msra.mxu0 0
    %593 = vmatprep.subr.bf16.mxu0 0
    %594 = vmatpush2.bf16.msra.mxu0 0
    %595 = vmatprep.subr.bf16.mxu0 0
    %596 = vmatpush2.bf16.msra.mxu0 0
    %597 = vmatprep.subr.bf16.mxu0 0
    %598 = vmatpush2.bf16.msra.mxu0 0
    %599 = vmatprep.subr.bf16.mxu0 0
    %600 = vmatpush2.bf16.msra.mxu0 0
    %601 = vmatprep.subr.bf16.mxu0 0
    %602 = vmatpush2.bf16.msra.mxu0 0
    %603 = vmatprep.subr.bf16.mxu0 0
    %604 = vmatpush2.bf16.msra.mxu0 0
    %605 = vmatprep.subr.bf16.mxu0 0
    %606 = vmatpush2.bf16.msra.mxu0 0
    %607 = vmatprep.mubr.bf16.mxu0 0
    %608 = vmatmul.mubr.bf16.gmra.mxu0 %v570
    %v609 = vpop.f32.mrf.mxu0
    %v610 = vadd.f32 0.0, %v609
    %v611 = vpop.f32.mrf.mxu0
    %v612 = vpop.f32.mrf.mxu0
    %v613 = vpop.f32.mrf.mxu0
    %614 = vdwg.mxu0
    %617 = vrot.lane.b32.xlu0 %v562, 16
    %v618 = vpop.permute.xlu0 %617
    %619 = vrot.lane.b32.xlu0 %v610, 16
    %v620 = vpop.permute.xlu0 %619
    %v623 = vsel %vm177, %v342, %v618
    %v624 = vsel %vm177, %v390, %v620
    %v625 = vpack.c.bf16 %v624, %v623
    %v626 = vld [vmem:[#allocation7] sm:$0xf]
    %v627 = vld [vmem:[#allocation7 + $0x4] sm:$0xf]
    %v628 = vld [vmem:[#allocation7 + $0x8] sm:$0xf]
    %v629 = vld [vmem:[#allocation7 + $0xc] sm:$0xf]
    %v634 = vunpack.c.l.b16 %v626
    %v635 = vunpack.c.l.b16 %v627
    %v636 = vunpack.c.l.b16 %v628
    %v637 = vunpack.c.l.b16 %v629
    %v638 = vpack.c.b16 %v635, %v634
    %v639 = vpack.c.b16 %v637, %v636
    %v643 = vsel %vm65, %v625, 0
    %645 = vmatprep.subr.bf16.mxu0 0
    %646 = vmatpush1.bf16.msra.mxu0 0
    %647 = vmatprep.subr.bf16.mxu0 0
    %648 = vmatpush1.bf16.msra.mxu0 0
    %649 = vmatprep.subr.bf16.mxu0 0
    %650 = vmatpush1.bf16.msra.mxu0 0
    %651 = vmatprep.subr.bf16.mxu0 0
    %652 = vmatpush1.bf16.msra.mxu0 0
    %653 = vmatprep.subr.bf16.mxu0 0
    %654 = vmatpush1.bf16.msra.mxu0 0
    %655 = vmatprep.subr.bf16.mxu0 0
    %656 = vmatpush1.bf16.msra.mxu0 0
    %657 = vmatprep.subr.bf16.mxu0 0
    %658 = vmatpush1.bf16.msra.mxu0 %v639
    %659 = vmatprep.subr.bf16.mxu0 0
    %660 = vmatpush1.bf16.msra.mxu0 %v638
    %661 = vmatprep.subr.bf16.mxu0 0
    %662 = vmatpush2.bf16.msra.mxu0 0
    %663 = vmatprep.subr.bf16.mxu0 0
    %664 = vmatpush2.bf16.msra.mxu0 0
    %665 = vmatprep.subr.bf16.mxu0 0
    %666 = vmatpush2.bf16.msra.mxu0 0
    %667 = vmatprep.subr.bf16.mxu0 0
    %668 = vmatpush2.bf16.msra.mxu0 0
    %669 = vmatprep.subr.bf16.mxu0 0
    %670 = vmatpush2.bf16.msra.mxu0 0
    %671 = vmatprep.subr.bf16.mxu0 0
    %672 = vmatpush2.bf16.msra.mxu0 0
    %673 = vmatprep.subr.bf16.mxu0 0
    %674 = vmatpush2.bf16.msra.mxu0 0
    %675 = vmatprep.subr.bf16.mxu0 0
    %676 = vmatpush2.bf16.msra.mxu0 0
    %677 = vmatprep.mubr.bf16.mxu0 0
    %678 = vmatmul.mubr.bf16.gmra.mxu0 %v643
    %v679 = vpop.f32.mrf.mxu0
    %v680 = vadd.f32 0.0, %v679
    %v681 = vpop.f32.mrf.mxu0
    %v682 = vpop.f32.mrf.mxu0
    %v683 = vadd.f32 0.0, %v682
    %v684 = vpop.f32.mrf.mxu0
    %685 = vdwg.mxu0
    %686 = vst.msk [vmem:[#allocation8] sm:$0xff] %vm65, %v680
    %687 = vst.msk [vmem:[#allocation8 + $0x8] sm:$0xff] %vm65, %v683
    // Predicated region
    $region34: #{tpu_custom_call.1} parent=1 // pred_check
      _
    $region35: #{tpu_custom_call.1} parent=1 // pred_check_branch
      %689 = sbr.rel (0) target = $region37
    $region36: #{tpu_custom_call.1} parent=1 // pred_region
      %s691 = ssub.s32 256, 256
      %692 = vsyncadd [#allocation4], %s691
      %s693 = sshll.u32 [#allocation8], 4
      %s694 = int_to_ptr.vmem [resolvable:$true] %s693
      %699 = dma.vmem_to_hbm [thread:$0]  %s694, 256, %s5, [#allocation4], 128, 128, 8
    $region37: #{tpu_custom_call.1} parent=1 // pred_fallthru
      _
    // Predicated region
    $region38: #{tpu_custom_call.1} parent=1 // pred_check
      _
    $region39: #{tpu_custom_call.1} parent=1 // pred_check_branch
      %701 = sbr.rel (0) target = $region41
    $region40: #{tpu_custom_call.1} parent=1 // pred_region
      %702 = dma.done [#allocation4], 256
    $region41: #{tpu_custom_call.1} parent=1 // pred_fallthru
      _
    %703 = vsyncpa [#allocation3], 1
    %704 = vsyncpa [#allocation6], 1
    %705 = vsyncpa [#allocation4], 1

</llo_original>
